<compile_context>
chip_gen: v7x
topology: tpu7x:2x2x1
jax: 0.10.0
libtpu: 0.0.40
codegen_flags: <defaults>
</compile_context>

<pallas_src>
import functools

import jax
import jax.numpy as jnp
from jax import lax
from jax.experimental import pallas as pl
from jax.experimental.pallas import tpu as pltpu


def _round_up(v, m):
    return (v + m - 1) // m * m


def _vmem_limit_bytes():
    """Generation-aware scoped-VMEM limit (v7x: 64 MiB/TC, v5e/v6e: 128 MiB)."""
    try:
        cap = int(pltpu.get_tpu_info().vmem_capacity_bytes)
    except Exception:
        cap = 64 * 1024 * 1024  # conservative default (v7x per-TC VMEM)
    return min(cap * 3 // 4, 96 * 1024 * 1024)


# ----------------------------------------------------------------------------
# Two-pass path, pass 1:  a_raw[b] = sum_l xs[b,:,l] . xp[b,:,l]^T
# ----------------------------------------------------------------------------
def _gram_kernel(x_ref, wsp_ref, bsp_ref, a_ref, *, num_s):
    @pl.when(pl.program_id(1) == 0)
    def _():
        a_ref[...] = jnp.zeros_like(a_ref)

    xb = x_ref[...].astype(jnp.bfloat16)                                 # (Cp, TL)
    # conv_state + conv_proj fused into one channel matmul (bf16 in, f32 acc).
    xsp = jnp.dot(wsp_ref[...], xb,
                  preferred_element_type=jnp.float32) + bsp_ref[...]     # (Sp+Np, TL)
    xs = xsp[:num_s].astype(jnp.bfloat16)                                # (Sp, TL)
    xp = xsp[num_s:].astype(jnp.bfloat16)                                # (Np, TL)
    # xs . xp^T without materializing a transpose: contract the lane dims.
    a_ref[...] += lax.dot_general(xs, xp, (((1,), (1,)), ((), ())),
                                  preferred_element_type=jnp.float32)


# ----------------------------------------------------------------------------
# Two-pass path, pass 2 (folded, Cp <= 2*Np):  out = x + M2 @ x + shift2
# ----------------------------------------------------------------------------
def _proj_kernel(x_ref, m2_ref, shift_ref, out_ref):
    x = x_ref[...]                                                       # (Cp, TL) f32
    z = jnp.dot(m2_ref[...], x.astype(jnp.bfloat16),
                preferred_element_type=jnp.float32)                      # (Cp, TL) f32
    out_ref[...] = x + z + shift_ref[...]


# ----------------------------------------------------------------------------
# Two-pass path, pass 2 (unfolded, Cp > 2*Np): out = x + m @ (Wp x + bp) + shift
# ----------------------------------------------------------------------------
def _proj2_kernel(x_ref, m_ref, wp_ref, bp_ref, shift_ref, out_ref):
    x = x_ref[...]                                                       # (Cp, TL) f32
    xp = jnp.dot(wp_ref[...], x.astype(jnp.bfloat16),
                 preferred_element_type=jnp.float32) + bp_ref[...]       # (Np, TL)
    z = jnp.dot(m_ref[...], xp.astype(jnp.bfloat16),
                preferred_element_type=jnp.float32)                      # (Cp, TL)
    out_ref[...] = x + z + shift_ref[...]


# ----------------------------------------------------------------------------
# Fused single-pass kernel (grid over B only, slab resident in VMEM).
# ----------------------------------------------------------------------------
def _fused_kernel(x_ref, wsp_ref, bsp_ref, corr_ref, w1_ref, b1_ref, w2_ref,
                  wfc_ref, wp_ref, bp_ref, shift_ref, out_ref, gram_ref,
                  *, num_s, tl, n_chunks, inv_l):
    gram_ref[...] = jnp.zeros_like(gram_ref)

    def gram_step(i, carry):
        start = pl.multiple_of(i * tl, tl)
        xb = x_ref[:, pl.ds(start, tl)].astype(jnp.bfloat16)             # (Cp, TL)
        xsp = jnp.dot(wsp_ref[...], xb,
                      preferred_element_type=jnp.float32) + bsp_ref[...]
        xs = xsp[:num_s].astype(jnp.bfloat16)
        xp = xsp[num_s:].astype(jnp.bfloat16)
        gram_ref[...] += lax.dot_general(xs, xp, (((1,), (1,)), ((), ())),
                                         preferred_element_type=jnp.float32)
        return carry

    lax.fori_loop(0, n_chunks, gram_step, 0, unroll=n_chunks <= 4)

    # Tiny GCN in f32, then fold fc_2*BN and conv_proj into M2 / shift2.
    # (Padded lanes only leak the biases; corr_ref removes that analytically.)
    a = (gram_ref[...] - corr_ref[...]) * inv_l                          # (Sp, Np)
    h = lax.dot_general(a, w1_ref[...], (((1,), (1,)), ((), ())),
                        preferred_element_type=jnp.float32) + b1_ref[...]
    h = jnp.maximum(h + a, 0.0)                                          # residual + ReLU
    g = jnp.dot(w2_ref[...], h, preferred_element_type=jnp.float32)      # (Sp, Np)
    m = jnp.dot(wfc_ref[...], g, preferred_element_type=jnp.float32)     # (Cp, Np)
    m2 = jnp.dot(m, wp_ref[...], preferred_element_type=jnp.float32)     # (Cp, Cp)
    shift2 = jnp.dot(m, bp_ref[...],
                     preferred_element_type=jnp.float32) + shift_ref[...]  # (Cp, 1)
    m2b = m2.astype(jnp.bfloat16)                                        # cast once

    def out_step(i, carry):
        start = pl.multiple_of(i * tl, tl)
        xc = x_ref[:, pl.ds(start, tl)]                                  # (Cp, TL) f32
        z = jnp.dot(m2b, xc.astype(jnp.bfloat16),
                    preferred_element_type=jnp.float32)
        out_ref[:, pl.ds(start, tl)] = xc + z + shift2
        return carry

    lax.fori_loop(0, n_chunks, out_step, 0, unroll=n_chunks <= 4)


# ----------------------------------------------------------------------------
# Wrapper
# ----------------------------------------------------------------------------
def feature_interaction_graph(x, params, *, force_two_pass=False):
    """x: (B, C_in, D, H, W) float32.  Returns (B, C_in, D, H, W) float32."""
    B, C, D, H, W = x.shape
    L = D * H * W
    S = params["w_state"].shape[0]
    N = params["w_proj"].shape[0]

    f32, bf16 = jnp.float32, jnp.bfloat16
    Cp = _round_up(C, 8)
    Sp = _round_up(S, 16)
    Np = _round_up(N, 16)

    vmem_limit = _vmem_limit_bytes()
    block_budget = vmem_limit // 2          # headroom for weights / scratch / compiler

    # Lane tile: big enough that per-step DMAs are not grid-overhead bound,
    # small enough that double-buffered (x-in + out) blocks fit the budget.
    tl_budget = max(512, (block_budget // (16 * Cp)) // 128 * 128)
    TL = min(4096, tl_budget, _round_up(L, 128))
    Lp = _round_up(L, TL)
    nL = Lp // TL

    # ---- zero-padded / folded parameters ----
    def padw(w, r, c):
        return jnp.pad(w.astype(f32), ((0, r - w.shape[0]), (0, c - w.shape[1])))

    w_state = padw(params["w_state"], Sp, Cp)
    w_proj = padw(params["w_proj"], Np, Cp)
    b_state = jnp.pad(params["b_state"].astype(f32), (0, Sp - S))
    b_proj = jnp.pad(params["b_proj"].astype(f32), (0, Np - N))

    w_sp = jnp.concatenate([w_state, w_proj], axis=0).astype(bf16)       # (Sp+Np, Cp)
    b_sp = jnp.concatenate([b_state, b_proj], 0).reshape(Sp + Np, 1)     # f32

    w1 = padw(params["w1"], Np, Np)
    b1 = jnp.pad(params["b1"].astype(f32), (0, Np - N)).reshape(1, Np)
    w2 = padw(params["w2"], Sp, Sp)
    # Fold BN scale into fc_2 weight; keep BN shift separate.
    wfc = padw(params["bn_scale"][:, None] * params["w_fc2"], Cp, Sp)
    shift = jnp.pad(params["bn_shift"].astype(f32), (0, Cp - C)).reshape(Cp, 1)

    # Bias-leak correction for the zero-padded lanes (l >= L): each padded lane
    # contributes outer(b_state, b_proj) to the raw Gram sum.
    corr = float(Lp - L) * jnp.outer(b_state, b_proj)                    # (Sp, Np)

    xf = jnp.pad(x.reshape(B, C, L).astype(f32),
                 ((0, 0), (0, Cp - C), (0, Lp - L)))

    # ---- fused single-pass path: slab (+ double-buffered in/out) fits VMEM ----
    fused_bytes = 4 * Cp * Lp * 4 + 2 * 1024 * 1024
    if (not force_two_pass) and fused_bytes <= block_budget:
        out_flat = pl.pallas_call(
            functools.partial(_fused_kernel, num_s=Sp, tl=TL, n_chunks=nL,
                              inv_l=1.0 / L),
            out_shape=jax.ShapeDtypeStruct((B, Cp, Lp), f32),
            grid_spec=pltpu.PrefetchScalarGridSpec(
                num_scalar_prefetch=0,
                grid=(B,),
                in_specs=[
                    pl.BlockSpec((None, Cp, Lp), lambda b: (b, 0, 0)),   # x slab
                    pl.BlockSpec((Sp + Np, Cp), lambda b: (0, 0)),       # [Ws;Wp] bf16
                    pl.BlockSpec((Sp + Np, 1), lambda b: (0, 0)),        # [bs;bp]
                    pl.BlockSpec((Sp, Np), lambda b: (0, 0)),            # bias corr
                    pl.BlockSpec((Np, Np), lambda b: (0, 0)),            # W1
                    pl.BlockSpec((1, Np), lambda b: (0, 0)),             # b1
                    pl.BlockSpec((Sp, Sp), lambda b: (0, 0)),            # W2
                    pl.BlockSpec((Cp, Sp), lambda b: (0, 0)),            # bn_scale*Wfc2
                    pl.BlockSpec((Np, Cp), lambda b: (0, 0)),            # W_proj f32
                    pl.BlockSpec((Np, 1), lambda b: (0, 0)),             # b_proj
                    pl.BlockSpec((Cp, 1), lambda b: (0, 0)),             # bn_shift
                ],
                out_specs=pl.BlockSpec((None, Cp, Lp), lambda b: (b, 0, 0)),
                scratch_shapes=[pltpu.VMEM((Sp, Np), f32)],
            ),
            compiler_params=pltpu.CompilerParams(
                dimension_semantics=("parallel",),
                vmem_limit_bytes=vmem_limit,
            ),
        )(xf, w_sp, b_sp, corr, w1, b1, w2, wfc, w_proj,
          b_proj.reshape(Np, 1), shift)
        return out_flat[:, :C, :L].reshape(B, C, D, H, W)

    # ---- two-pass path ----
    # Pass 1: raw per-batch Gram matrix (accumulator resident across L axis).
    a_raw = pl.pallas_call(
        functools.partial(_gram_kernel, num_s=Sp),
        out_shape=jax.ShapeDtypeStruct((B, Sp, Np), f32),
        grid_spec=pltpu.PrefetchScalarGridSpec(
            num_scalar_prefetch=0,
            grid=(B, nL),
            in_specs=[
                pl.BlockSpec((None, Cp, TL), lambda b, l: (b, 0, l)),    # x
                pl.BlockSpec((Sp + Np, Cp), lambda b, l: (0, 0)),        # [Ws;Wp] bf16
                pl.BlockSpec((Sp + Np, 1), lambda b, l: (0, 0)),         # [bs;bp]
            ],
            out_specs=pl.BlockSpec((None, Sp, Np), lambda b, l: (b, 0, 0)),
        ),
        compiler_params=pltpu.CompilerParams(
            dimension_semantics=("parallel", "arbitrary"),
            vmem_limit_bytes=vmem_limit,
        ),
    )(xf, w_sp, b_sp)

    # Hoisted GCN + fc_2/BN fold (tiny, plain JAX, f32).
    a = (a_raw - corr[None]) * (1.0 / L)                                 # (B, Sp, Np)
    h = jnp.einsum("bsn,mn->bsm", a, w1) + b1.reshape(1, 1, Np)
    h = jnp.maximum(h + a, 0.0)
    g = jnp.einsum("ts,bsn->btn", w2, h)                                 # (B, Sp, Np)
    m = jnp.einsum("cs,bsn->bcn", wfc, g)                                # (B, Cp, Np)

    pass2_params = pltpu.CompilerParams(
        dimension_semantics=("parallel", "parallel"),                    # 2-TC on v7x
        vmem_limit_bytes=vmem_limit,
    )

    if Cp <= 2 * Np:
        # Fold conv_proj as well: out = x + M2 @ x + shift2 (one matmul/tile).
        m2 = jnp.einsum("bcn,nd->bcd", m, w_proj).astype(bf16)           # (B, Cp, Cp)
        shift2 = (jnp.einsum("bcn,n->bc", m, b_proj)
                  + shift.reshape(1, Cp))[..., None]                     # (B, Cp, 1)
        out_flat = pl.pallas_call(
            _proj_kernel,
            out_shape=jax.ShapeDtypeStruct((B, Cp, Lp), f32),
            grid_spec=pltpu.PrefetchScalarGridSpec(
                num_scalar_prefetch=0,
                grid=(B, nL),
                in_specs=[
                    pl.BlockSpec((None, Cp, TL), lambda b, l: (b, 0, l)),
                    pl.BlockSpec((None, Cp, Cp), lambda b, l: (b, 0, 0)),
                    pl.BlockSpec((None, Cp, 1), lambda b, l: (b, 0, 0)),
                ],
                out_specs=pl.BlockSpec((None, Cp, TL), lambda b, l: (b, 0, l)),
            ),
            compiler_params=pass2_params,
        )(xf, m2, shift2)
    else:
        # Cp > 2*Np: the folded (Cp,Cp) matmul would cost more MXU work than
        # the two-matmul form, so keep W_proj separate (m is still hoisted).
        out_flat = pl.pallas_call(
            _proj2_kernel,
            out_shape=jax.ShapeDtypeStruct((B, Cp, Lp), f32),
            grid_spec=pltpu.PrefetchScalarGridSpec(
                num_scalar_prefetch=0,
                grid=(B, nL),
                in_specs=[
                    pl.BlockSpec((None, Cp, TL), lambda b, l: (b, 0, l)),  # x
                    pl.BlockSpec((None, Cp, Np), lambda b, l: (b, 0, 0)),  # m (bf16)
                    pl.BlockSpec((Np, Cp), lambda b, l: (0, 0)),           # W_proj bf16
                    pl.BlockSpec((Np, 1), lambda b, l: (0, 0)),            # b_proj
                    pl.BlockSpec((Cp, 1), lambda b, l: (0, 0)),            # bn_shift
                ],
                out_specs=pl.BlockSpec((None, Cp, TL), lambda b, l: (b, 0, l)),
            ),
            compiler_params=pass2_params,
        )(xf, m.astype(bf16), w_proj.astype(bf16), b_proj.reshape(Np, 1), shift)

    return out_flat[:, :C, :L].reshape(B, C, D, H, W)


# ----------------------------------------------------------------------------
# Pure-JAX f32 reference (sanity check)
# ----------------------------------------------------------------------------
def _reference(x, params):
    B, C, D, H, W = x.shape
    L = D * H * W
    xf = x.reshape(B, C, L)
    xs = jnp.einsum("sc,bcl->bsl", params["w_state"], xf) + params["b_state"][None, :, None]
    xp = jnp.einsum("nc,bcl->bnl", params["w_proj"], xf) + params["b_proj"][None, :, None]
    a = jnp.einsum("bsl,bnl->bsn", xs, xp) / L
    h = jnp.einsum("bsn,mn->bsm", a, params["w1"]) + params["b1"][None, None, :]
    h = jnp.maximum(h + a, 0.0)
    g = jnp.einsum("ts,bsn->btn", params["w2"], h)
    y = jnp.einsum("bsn,bnl->bsl", g, xp)
    z = jnp.einsum("cs,bsl->bcl", params["w_fc2"], y)
    z = z * params["bn_scale"][None, :, None] + params["bn_shift"][None, :, None]
    return (xf + z).reshape(B, C, D, H, W)


def make_params(key, num_in, num_mid):
    num_s = 2 * num_mid
    num_n = 1 * num_mid
    ks = jax.random.split(key, 8)
    scale = 0.1
    p = {
        "w_state": scale * jax.random.normal(ks[0], (num_s, num_in), jnp.float32),
        "b_state": scale * jax.random.normal(ks[1], (num_s,), jnp.float32),
        "w_proj":  scale * jax.random.normal(ks[2], (num_n, num_in), jnp.float32),
        "b_proj":  scale * jax.random.normal(ks[3], (num_n,), jnp.float32),
        "w1":      scale * jax.random.normal(ks[4], (num_n, num_n), jnp.float32),
        "b1":      scale * jax.random.normal(ks[5], (num_n,), jnp.float32),
        "w2":      scale * jax.random.normal(ks[6], (num_s, num_s), jnp.float32),
        "w_fc2":   scale * jax.random.normal(ks[7], (num_in, num_s), jnp.float32),
    }
    # BatchNorm3d (eval mode): gamma=1, beta=0, running_mean=0, running_var=1.
    eps = 1e-5
    gamma = jnp.ones((num_in,), jnp.float32)
    beta = jnp.zeros((num_in,), jnp.float32)
    r_mean = jnp.zeros((num_in,), jnp.float32)
    r_var = jnp.ones((num_in,), jnp.float32)
    bn_scale = gamma / jnp.sqrt(r_var + eps)
    p["bn_scale"] = bn_scale
    p["bn_shift"] = beta - r_mean * bn_scale
    return p


if __name__ == "__main__":
    key = jax.random.PRNGKey(0)
    k_x, k_p, k_x2, k_p2 = jax.random.split(key, 4)

    def check(out, ref, name):
        out = jax.block_until_ready(out)
        assert out.shape == ref.shape, name
        denom = float(jnp.maximum(jnp.max(jnp.abs(ref)), 1.0))
        err = float(jnp.max(jnp.abs(out - ref))) / denom
        assert err < 2.5e-2, f"{name}: relative error {err}"

    # Config A: batch=2, num_in=4, num_mid=4 (num_s=8, num_n=4), spatial 4x8x8.
    B, C_in, num_mid = 2, 4, 4
    D, H, W = 4, 8, 8
    x = jax.random.normal(k_x, (B, C_in, D, H, W), jnp.float32)
    params = make_params(k_p, C_in, num_mid)
    ref = _reference(x, params)
    check(feature_interaction_graph(x, params), ref, "fused")
    check(feature_interaction_graph(x, params, force_two_pass=True), ref, "two_pass_folded")

    # Config B: wide channels (Cp > 2*Np) exercises the unfolded pass-2 kernel.
    B2, C_in2, num_mid2 = 2, 40, 4
    D2, H2, W2 = 2, 8, 8
    x2 = jax.random.normal(k_x2, (B2, C_in2, D2, H2, W2), jnp.float32)
    params2 = make_params(k_p2, C_in2, num_mid2)
    ref2 = _reference(x2, params2)
    check(feature_interaction_graph(x2, params2, force_two_pass=True), ref2,
          "two_pass_unfolded")

    print("KERNEL_OK")
</pallas_src>

<mosaic_0001>
module attributes {stable_mosaic.version = 11 : i64} {
  func.func @_fused_kernel(%arg0: i32, %arg1: memref<1x8x256xf32, #tpu.memory_space<vmem>>, %arg2: memref<32x8xbf16, #tpu.memory_space<vmem>>, %arg3: memref<32x1xf32, #tpu.memory_space<vmem>>, %arg4: memref<16x16xf32, #tpu.memory_space<vmem>>, %arg5: memref<16x16xf32, #tpu.memory_space<vmem>>, %arg6: memref<1x16xf32, #tpu.memory_space<vmem>>, %arg7: memref<16x16xf32, #tpu.memory_space<vmem>>, %arg8: memref<8x16xf32, #tpu.memory_space<vmem>>, %arg9: memref<16x8xf32, #tpu.memory_space<vmem>>, %arg10: memref<16x1xf32, #tpu.memory_space<vmem>>, %arg11: memref<8x1xf32, #tpu.memory_space<vmem>>, %arg12: memref<1x8x256xf32, #tpu.memory_space<vmem>>, %arg13: memref<16x16xf32, #tpu.memory_space<vmem>>) attributes {dimension_semantics = [#tpu.dimension_semantics<parallel>], iteration_bounds = array<i64: 2>, scalar_prefetch = 0 : i64, scratch_operands = 1 : i64, tpu.core_type = #tpu.core_type<tc>, window_params = [{transform_indices = @transform_0, window_bounds = array<i64: 1, 8, 256>}, {pipeline_mode = #tpu.pipeline_mode<synchronous>, transform_indices = @transform_1, window_bounds = array<i64: 32, 8>}, {pipeline_mode = #tpu.pipeline_mode<synchronous>, transform_indices = @transform_2, window_bounds = array<i64: 32, 1>}, {pipeline_mode = #tpu.pipeline_mode<synchronous>, transform_indices = @transform_3, window_bounds = array<i64: 16, 16>}, {pipeline_mode = #tpu.pipeline_mode<synchronous>, transform_indices = @transform_4, window_bounds = array<i64: 16, 16>}, {pipeline_mode = #tpu.pipeline_mode<synchronous>, transform_indices = @transform_5, window_bounds = array<i64: 1, 16>}, {pipeline_mode = #tpu.pipeline_mode<synchronous>, transform_indices = @transform_6, window_bounds = array<i64: 16, 16>}, {pipeline_mode = #tpu.pipeline_mode<synchronous>, transform_indices = @transform_7, window_bounds = array<i64: 8, 16>}, {pipeline_mode = #tpu.pipeline_mode<synchronous>, transform_indices = @transform_8, window_bounds = array<i64: 16, 8>}, {pipeline_mode = #tpu.pipeline_mode<synchronous>, transform_indices = @transform_9, window_bounds = array<i64: 16, 1>}, {pipeline_mode = #tpu.pipeline_mode<synchronous>, transform_indices = @transform_10, window_bounds = array<i64: 8, 1>}, {transform_indices = @transform_11, window_bounds = array<i64: 1, 8, 256>}]} {
    %cst = arith.constant 0.000000e+00 : f32
    %0 = vector.broadcast %cst : f32 to vector<16x16xf32>
    %c0 = arith.constant 0 : index
    %c0_0 = arith.constant 0 : index
    %1 = vector.load %arg13[%c0, %c0_0] : memref<16x16xf32, #tpu.memory_space<vmem>>, vector<16x16xf32>
    tpu.vector_store %arg13[%c0, %c0_0], %0 {strides = array<i32>} : memref<16x16xf32, #tpu.memory_space<vmem>>, vector<16x16xf32>,
    %c0_i32 = arith.constant 0 : i32
    %c256_i32 = arith.constant 256 : i32
    %2 = arith.muli %c0_i32, %c256_i32 : i32
    %3 = tpu.assume_multiple %2, 256 : i32
    %c0_1 = arith.constant 0 : index
    %c0_2 = arith.constant 0 : index
    %4 = arith.index_cast %3 : i32 to index
    %5 = vector.load %arg1[%c0_1, %c0_2, %4] : memref<1x8x256xf32, #tpu.memory_space<vmem>>, vector<1x8x256xf32>
    %6 = vector.shape_cast %5 : vector<1x8x256xf32> to vector<8x256xf32>
    %7 = arith.truncf %6 : vector<8x256xf32> to vector<8x256xbf16>
    %c0_3 = arith.constant 0 : index
    %c0_4 = arith.constant 0 : index
    %8 = vector.load %arg2[%c0_3, %c0_4] : memref<32x8xbf16, #tpu.memory_space<vmem>>, vector<32x8xbf16>
    %cst_5 = arith.constant dense<0.000000e+00> : vector<32x256xf32>
    %9 = tpu.matmul %8, %7, %cst_5 {dimension_numbers = #tpu.dot_dimension_numbers<[1], [0], [0], [1], [0, 0, 1, 1], [], []>} : vector<32x8xbf16>, vector<8x256xbf16>, vector<32x256xf32> -> vector<32x256xf32>
    %c0_6 = arith.constant 0 : index
    %c0_7 = arith.constant 0 : index
    %10 = vector.load %arg3[%c0_6, %c0_7] : memref<32x1xf32, #tpu.memory_space<vmem>>, vector<32x1xf32>
    %11 = vector.broadcast %10 : vector<32x1xf32> to vector<32x256xf32>
    %12 = arith.addf %9, %11 : vector<32x256xf32>
    %13 = vector.extract_strided_slice %12 {offsets = [0, 0], sizes = [16, 256], strides = [1, 1]} : vector<32x256xf32> to vector<16x256xf32>
    %14 = arith.truncf %13 : vector<16x256xf32> to vector<16x256xbf16>
    %15 = vector.extract_strided_slice %12 {offsets = [16, 0], sizes = [16, 256], strides = [1, 1]} : vector<32x256xf32> to vector<16x256xf32>
    %16 = arith.truncf %15 : vector<16x256xf32> to vector<16x256xbf16>
    %c0_8 = arith.constant 0 : index
    %c0_9 = arith.constant 0 : index
    %17 = vector.load %arg13[%c0_8, %c0_9] : memref<16x16xf32, #tpu.memory_space<vmem>>, vector<16x16xf32>
    %cst_10 = arith.constant dense<0.000000e+00> : vector<16x16xf32>
    %18 = tpu.matmul %14, %16, %cst_10 {dimension_numbers = #tpu.dot_dimension_numbers<[1], [1], [0], [0], [0, 0, 1, 0], [], []>} : vector<16x256xbf16>, vector<16x256xbf16>, vector<16x16xf32> -> vector<16x16xf32>
    %19 = arith.addf %17, %18 : vector<16x16xf32>
    %c0_11 = arith.constant 0 : index
    %c0_12 = arith.constant 0 : index
    %20 = vector.load %arg13[%c0_11, %c0_12] : memref<16x16xf32, #tpu.memory_space<vmem>>, vector<16x16xf32>
    tpu.vector_store %arg13[%c0_11, %c0_12], %19 {strides = array<i32>} : memref<16x16xf32, #tpu.memory_space<vmem>>, vector<16x16xf32>,
    %c1_i32 = arith.constant 1 : i32
    %c0_13 = arith.constant 0 : index
    %c0_14 = arith.constant 0 : index
    %21 = vector.load %arg13[%c0_13, %c0_14] : memref<16x16xf32, #tpu.memory_space<vmem>>, vector<16x16xf32>
    %c0_15 = arith.constant 0 : index
    %c0_16 = arith.constant 0 : index
    %22 = vector.load %arg4[%c0_15, %c0_16] : memref<16x16xf32, #tpu.memory_space<vmem>>, vector<16x16xf32>
    %23 = arith.subf %21, %22 : vector<16x16xf32>
    %cst_17 = arith.constant 3.906250e-03 : f32
    %24 = vector.broadcast %cst_17 : f32 to vector<16x16xf32>
    %25 = arith.mulf %23, %24 : vector<16x16xf32>
    %c0_18 = arith.constant 0 : index
    %c0_19 = arith.constant 0 : index
    %26 = vector.load %arg5[%c0_18, %c0_19] : memref<16x16xf32, #tpu.memory_space<vmem>>, vector<16x16xf32>
    %cst_20 = arith.constant dense<0.000000e+00> : vector<16x16xf32>
    %27 = tpu.matmul %25, %26, %cst_20 {dimension_numbers = #tpu.dot_dimension_numbers<[1], [1], [0], [0], [0, 0, 1, 0], [], []>} : vector<16x16xf32>, vector<16x16xf32>, vector<16x16xf32> -> vector<16x16xf32>
    %c0_21 = arith.constant 0 : index
    %c0_22 = arith.constant 0 : index
    %28 = vector.load %arg6[%c0_21, %c0_22] : memref<1x16xf32, #tpu.memory_space<vmem>>, vector<1x16xf32>
    %29 = vector.broadcast %28 : vector<1x16xf32> to vector<16x16xf32>
    %30 = arith.addf %27, %29 : vector<16x16xf32>
    %31 = arith.addf %30, %25 : vector<16x16xf32>
    %cst_23 = arith.constant 0.000000e+00 : f32
    %32 = vector.broadcast %cst_23 : f32 to vector<16x16xf32>
    %33 = arith.maximumf %31, %32 : vector<16x16xf32>
    %c0_24 = arith.constant 0 : index
    %c0_25 = arith.constant 0 : index
    %34 = vector.load %arg7[%c0_24, %c0_25] : memref<16x16xf32, #tpu.memory_space<vmem>>, vector<16x16xf32>
    %cst_26 = arith.constant dense<0.000000e+00> : vector<16x16xf32>
    %35 = tpu.matmul %34, %33, %cst_26 {dimension_numbers = #tpu.dot_dimension_numbers<[1], [0], [0], [1], [0, 0, 1, 1], [], []>} : vector<16x16xf32>, vector<16x16xf32>, vector<16x16xf32> -> vector<16x16xf32>
    %c0_27 = arith.constant 0 : index
    %c0_28 = arith.constant 0 : index
    %36 = vector.load %arg8[%c0_27, %c0_28] : memref<8x16xf32, #tpu.memory_space<vmem>>, vector<8x16xf32>
    %cst_29 = arith.constant dense<0.000000e+00> : vector<8x16xf32>
    %37 = tpu.matmul %36, %35, %cst_29 {dimension_numbers = #tpu.dot_dimension_numbers<[1], [0], [0], [1], [0, 0, 1, 1], [], []>} : vector<8x16xf32>, vector<16x16xf32>, vector<8x16xf32> -> vector<8x16xf32>
    %c0_30 = arith.constant 0 : index
    %c0_31 = arith.constant 0 : index
    %38 = vector.load %arg9[%c0_30, %c0_31] : memref<16x8xf32, #tpu.memory_space<vmem>>, vector<16x8xf32>
    %cst_32 = arith.constant dense<0.000000e+00> : vector<8x8xf32>
    %39 = tpu.matmul %37, %38, %cst_32 {dimension_numbers = #tpu.dot_dimension_numbers<[1], [0], [0], [1], [0, 0, 1, 1], [], []>} : vector<8x16xf32>, vector<16x8xf32>, vector<8x8xf32> -> vector<8x8xf32>
    %c0_33 = arith.constant 0 : index
    %c0_34 = arith.constant 0 : index
    %40 = vector.load %arg10[%c0_33, %c0_34] : memref<16x1xf32, #tpu.memory_space<vmem>>, vector<16x1xf32>
    %cst_35 = arith.constant dense<0.000000e+00> : vector<8x1xf32>
    %41 = tpu.matmul %37, %40, %cst_35 {dimension_numbers = #tpu.dot_dimension_numbers<[1], [0], [0], [1], [0, 0, 1, 1], [], []>} : vector<8x16xf32>, vector<16x1xf32>, vector<8x1xf32> -> vector<8x1xf32>
    %c0_36 = arith.constant 0 : index
    %c0_37 = arith.constant 0 : index
    %42 = vector.load %arg11[%c0_36, %c0_37] : memref<8x1xf32, #tpu.memory_space<vmem>>, vector<8x1xf32>
    %43 = arith.addf %41, %42 : vector<8x1xf32>
    %44 = arith.truncf %39 : vector<8x8xf32> to vector<8x8xbf16>
    %c0_i32_38 = arith.constant 0 : i32
    %c256_i32_39 = arith.constant 256 : i32
    %45 = arith.muli %c0_i32_38, %c256_i32_39 : i32
    %46 = tpu.assume_multiple %45, 256 : i32
    %c0_40 = arith.constant 0 : index
    %c0_41 = arith.constant 0 : index
    %47 = arith.index_cast %46 : i32 to index
    %48 = vector.load %arg1[%c0_40, %c0_41, %47] : memref<1x8x256xf32, #tpu.memory_space<vmem>>, vector<1x8x256xf32>
    %49 = vector.shape_cast %48 : vector<1x8x256xf32> to vector<8x256xf32>
    %50 = arith.truncf %49 : vector<8x256xf32> to vector<8x256xbf16>
    %cst_42 = arith.constant dense<0.000000e+00> : vector<8x256xf32>
    %51 = tpu.matmul %44, %50, %cst_42 {dimension_numbers = #tpu.dot_dimension_numbers<[1], [0], [0], [1], [0, 0, 1, 1], [], []>} : vector<8x8xbf16>, vector<8x256xbf16>, vector<8x256xf32> -> vector<8x256xf32>
    %52 = arith.addf %49, %51 : vector<8x256xf32>
    %53 = vector.broadcast %43 : vector<8x1xf32> to vector<8x256xf32>
    %54 = arith.addf %52, %53 : vector<8x256xf32>
    %c0_43 = arith.constant 0 : index
    %c0_44 = arith.constant 0 : index
    %55 = arith.index_cast %46 : i32 to index
    %56 = vector.load %arg12[%c0_43, %c0_44, %55] : memref<1x8x256xf32, #tpu.memory_space<vmem>>, vector<1x8x256xf32>
    %57 = vector.shape_cast %56 : vector<1x8x256xf32> to vector<8x256xf32>
    %58 = vector.shape_cast %54 : vector<8x256xf32> to vector<1x8x256xf32>
    tpu.vector_store %arg12[%c0_43, %c0_44, %55], %58 {strides = array<i32>} : memref<1x8x256xf32, #tpu.memory_space<vmem>>, vector<1x8x256xf32>,
    %c1_i32_45 = arith.constant 1 : i32
    return
  }
  func.func @transform_0(%arg0: i32) -> (i32, i32, i32) {
    %c0_i32 = arith.constant 0 : i32
    %c0_i32_0 = arith.constant 0 : i32
    %c0_i32_1 = arith.constant 0 : i32
    return %arg0, %c0_i32, %c0_i32_0 : i32, i32, i32
  }
  func.func @transform_1(%arg0: i32) -> (i32, i32) {
    %c0_i32 = arith.constant 0 : i32
    %c0_i32_0 = arith.constant 0 : i32
    %c0_i32_1 = arith.constant 0 : i32
    return %c0_i32, %c0_i32_0 : i32, i32
  }
  func.func @transform_2(%arg0: i32) -> (i32, i32) {
    %c0_i32 = arith.constant 0 : i32
    %c0_i32_0 = arith.constant 0 : i32
    %c0_i32_1 = arith.constant 0 : i32
    return %c0_i32, %c0_i32_0 : i32, i32
  }
  func.func @transform_3(%arg0: i32) -> (i32, i32) {
    %c0_i32 = arith.constant 0 : i32
    %c0_i32_0 = arith.constant 0 : i32
    %c0_i32_1 = arith.constant 0 : i32
    return %c0_i32, %c0_i32_0 : i32, i32
  }
  func.func @transform_4(%arg0: i32) -> (i32, i32) {
    %c0_i32 = arith.constant 0 : i32
    %c0_i32_0 = arith.constant 0 : i32
    %c0_i32_1 = arith.constant 0 : i32
    return %c0_i32, %c0_i32_0 : i32, i32
  }
  func.func @transform_5(%arg0: i32) -> (i32, i32) {
    %c0_i32 = arith.constant 0 : i32
    %c0_i32_0 = arith.constant 0 : i32
    %c0_i32_1 = arith.constant 0 : i32
    return %c0_i32, %c0_i32_0 : i32, i32
  }
  func.func @transform_6(%arg0: i32) -> (i32, i32) {
    %c0_i32 = arith.constant 0 : i32
    %c0_i32_0 = arith.constant 0 : i32
    %c0_i32_1 = arith.constant 0 : i32
    return %c0_i32, %c0_i32_0 : i32, i32
  }
  func.func @transform_7(%arg0: i32) -> (i32, i32) {
    %c0_i32 = arith.constant 0 : i32
    %c0_i32_0 = arith.constant 0 : i32
    %c0_i32_1 = arith.constant 0 : i32
    return %c0_i32, %c0_i32_0 : i32, i32
  }
  func.func @transform_8(%arg0: i32) -> (i32, i32) {
    %c0_i32 = arith.constant 0 : i32
    %c0_i32_0 = arith.constant 0 : i32
    %c0_i32_1 = arith.constant 0 : i32
    return %c0_i32, %c0_i32_0 : i32, i32
  }
  func.func @transform_9(%arg0: i32) -> (i32, i32) {
    %c0_i32 = arith.constant 0 : i32
    %c0_i32_0 = arith.constant 0 : i32
    %c0_i32_1 = arith.constant 0 : i32
    return %c0_i32, %c0_i32_0 : i32, i32
  }
  func.func @transform_10(%arg0: i32) -> (i32, i32) {
    %c0_i32 = arith.constant 0 : i32
    %c0_i32_0 = arith.constant 0 : i32
    %c0_i32_1 = arith.constant 0 : i32
    return %c0_i32, %c0_i32_0 : i32, i32
  }
  func.func @transform_11(%arg0: i32) -> (i32, i32, i32) {
    %c0_i32 = arith.constant 0 : i32
    %c0_i32_0 = arith.constant 0 : i32
    %c0_i32_1 = arith.constant 0 : i32
    return %arg0, %c0_i32, %c0_i32_0 : i32, i32, i32
  }
}

</mosaic_0001>

<llo_original>
// kernel: tpu_custom_call.1
$region0: #{tpu_custom_call.1}
  #allocation0 [shape = 'u32[]', space=smem, size = 0x4, offset = 0x4, fixed_abs, tag = 'smem constant byte address 0x4 - core index']
  #allocation1 [shape = 'u32[144,128]{1,0:T(1,128)}', space=vmem, size = 0x12000, scoped, tag = 'internal scratch']
  #allocation2 [shape = 'f32[16,16]{1,0:T(8,128)}', space=vmem, size = 0x2000, scoped, tag = 'scratch operand']
  %s0 = inlined_call_operand.vmem [shape: f32[2,8,256], index: 0, kind: input, shape index: {}]
  %s1 = inlined_call_operand.vmem [shape: bf16[32,8], index: 1, kind: input, shape index: {}]
  %s2 = inlined_call_operand.vmem [shape: f32[32,1], index: 2, kind: input, shape index: {}]
  %s3 = inlined_call_operand.vmem [shape: f32[16,16], index: 3, kind: input, shape index: {}]
  %s4 = inlined_call_operand.vmem [shape: f32[16,16], index: 4, kind: input, shape index: {}]
  %s5 = inlined_call_operand.vmem [shape: f32[1,16], index: 5, kind: input, shape index: {}]
  %s6 = inlined_call_operand.vmem [shape: f32[16,16], index: 6, kind: input, shape index: {}]
  %s7 = inlined_call_operand.vmem [shape: f32[8,16], index: 7, kind: input, shape index: {}]
  %s8 = inlined_call_operand.vmem [shape: f32[16,8], index: 8, kind: input, shape index: {}]
  %s9 = inlined_call_operand.vmem [shape: f32[16,1], index: 9, kind: input, shape index: {}]
  %s10 = inlined_call_operand.vmem [shape: f32[8,1], index: 10, kind: input, shape index: {}]
  %s11 = inlined_call_operand.hbm [shape: f32[2,8,256], index: 11, kind: output, shape index: {}]
  %s12 = sld [smem:[#allocation0]]
  $region77: #{tpu_custom_call.1} parent=0
    _
  %s14 = ssub.s32 1, %s12
  %s15 = scalar_select 0, %s14, %s12
  $region1: #{tpu_custom_call.1} parent=0
    #allocation3 [shape = 'u8[16384]{0}', space=vmem, size = 0x4000, scoped, tag = 'output window, operand 0']
    #allocation4 [shape = 's32[2]{0}', space=sflag, size = 0x8, scoped, tag = 'scoped memory for tpu_custom_call.1']
    %16 = vsyncpa [#allocation4], 0
    %s17 = scalar_lea.sflag [#allocation4], 1
    %18 = vsyncpa %s17, 0
    loop: start=0, step=1, limit=4
    $region2: #{tpu_custom_call.1} parent=1 // loop_pre_header
      _
    $region3: #{tpu_custom_call.1} parent=1 // loop_header
      %s20 = sphi 0, %s24
      %p21 = scmp.ge.s32.totalorder %s20, 4
      %s30 = sphi 0, %s32
      %s33 = sphi 0, %s30
      %s34 = sphi 0, %s33
      %s50 = sphi 0, %s34
      %s54 = sphi 0, %s54
      %s56 = sphi 0, %s54
      %s57 = sphi 0, %s56
      %s71 = sphi 0, %s57
      %s75 = sphi 0, %s75
      %s77 = sphi 0, %s75
      %s78 = sphi 0, %s77
      %s92 = sphi 0, %s78
      %s96 = sphi 0, %s96
      %s98 = sphi 0, %s96
      %s99 = sphi 0, %s98
      %s113 = sphi 0, %s99
      %s117 = sphi 0, %s117
      %s119 = sphi 0, %s117
      %s120 = sphi 0, %s119
      %s134 = sphi 0, %s120
      %s138 = sphi 0, %s138
      %s140 = sphi 0, %s138
      %s141 = sphi 0, %s140
      %s155 = sphi 0, %s141
      %s159 = sphi 0, %s159
      %s161 = sphi 0, %s159
      %s162 = sphi 0, %s161
      %s176 = sphi 0, %s162
      %s180 = sphi 0, %s180
      %s182 = sphi 0, %s180
      %s183 = sphi 0, %s182
      %s197 = sphi 0, %s183
      %s201 = sphi 0, %s201
      %s203 = sphi 0, %s201
      %s204 = sphi 0, %s203
      %s218 = sphi 0, %s204
      %s222 = sphi 0, %s222
      %s224 = sphi 0, %s222
      %s225 = sphi 0, %s224
      %s239 = sphi 0, %s225
      %s243 = sphi 0, %s243
      %s245 = sphi 0, %s243
      %s246 = sphi 0, %s245
      %s260 = sphi 0, %s246
      %s266 = sphi 0, %s268
      %s269 = sphi 0, %s266
      %s270 = sphi 0, %s269
      %s286 = sphi 0, %s270
    $region4: #{tpu_custom_call.1} parent=1 // loop_header_branch
      %23 = sbr.rel (%p21) target = $region8
    $region5: #{tpu_custom_call.1} parent=1 // loop_body
      %s25 = ssub.s32 %s20, 1
      %s26 = ssub.s32 %s20, 2
      %s27 = sadd.s32 %s20, 1
      %s28 = ssub.s32 %s20, %s27
      %p29 = scmp.eq.s32.totalorder %s28, 0
      %s31 = sadd.s32 %s30, 1
      %s32 = scalar_select %p29, %s30, %s31
      %p35 = pneg %p29
      %p36 = scmp.eq.s32.totalorder %s20, 1
      %p37 = por %p35, %p36
      %p38 = scmp.ne.s32.totalorder %s30, %s33
      %p39 = scmp.eq.s32.totalorder %s20, 0
      %p40 = por %p38, %p39
      %p41 = scmp.ne.s32.totalorder %s30, %s33
      %p42 = scmp.eq.s32.totalorder %s25, 1
      %p43 = por %p41, %p42
      %p44 = scmp.ne.s32.totalorder %s33, %s34
      %p45 = scmp.eq.s32.totalorder %s25, 0
      %p46 = por %p44, %p45
      %p47 = scmp.ne.s32.totalorder %s33, %s34
      %p48 = scmp.eq.s32.totalorder %s26, 1
      %p49 = por %p47, %p48
      %p51 = scmp.ne.s32.totalorder %s34, %s50
      %p52 = scmp.eq.s32.totalorder %s26, 0
      %p53 = por %p51, %p52
      %s55 = sadd.s32 %s54, 1
      %p58 = scmp.eq.s32.totalorder %s20, 1
      %p59 = scmp.ne.s32.totalorder %s54, %s56
      %p60 = scmp.eq.s32.totalorder %s20, 0
      %p61 = por %p59, %p60
      %p62 = scmp.ne.s32.totalorder %s54, %s56
      %p63 = scmp.eq.s32.totalorder %s25, 1
      %p64 = por %p62, %p63
      %p65 = scmp.ne.s32.totalorder %s56, %s57
      %p66 = scmp.eq.s32.totalorder %s25, 0
      %p67 = por %p65, %p66
      %p68 = scmp.ne.s32.totalorder %s56, %s57
      %p69 = scmp.eq.s32.totalorder %s26, 1
      %p70 = por %p68, %p69
      %p72 = scmp.ne.s32.totalorder %s57, %s71
      %p73 = scmp.eq.s32.totalorder %s26, 0
      %p74 = por %p72, %p73
      %s76 = sadd.s32 %s75, 1
      %p79 = scmp.eq.s32.totalorder %s20, 1
      %p80 = scmp.ne.s32.totalorder %s75, %s77
      %p81 = scmp.eq.s32.totalorder %s20, 0
      %p82 = por %p80, %p81
      %p83 = scmp.ne.s32.totalorder %s75, %s77
      %p84 = scmp.eq.s32.totalorder %s25, 1
      %p85 = por %p83, %p84
      %p86 = scmp.ne.s32.totalorder %s77, %s78
      %p87 = scmp.eq.s32.totalorder %s25, 0
      %p88 = por %p86, %p87
      %p89 = scmp.ne.s32.totalorder %s77, %s78
      %p90 = scmp.eq.s32.totalorder %s26, 1
      %p91 = por %p89, %p90
      %p93 = scmp.ne.s32.totalorder %s78, %s92
      %p94 = scmp.eq.s32.totalorder %s26, 0
      %p95 = por %p93, %p94
      %s97 = sadd.s32 %s96, 1
      %p100 = scmp.eq.s32.totalorder %s20, 1
      %p101 = scmp.ne.s32.totalorder %s96, %s98
      %p102 = scmp.eq.s32.totalorder %s20, 0
      %p103 = por %p101, %p102
      %p104 = scmp.ne.s32.totalorder %s96, %s98
      %p105 = scmp.eq.s32.totalorder %s25, 1
      %p106 = por %p104, %p105
      %p107 = scmp.ne.s32.totalorder %s98, %s99
      %p108 = scmp.eq.s32.totalorder %s25, 0
      %p109 = por %p107, %p108
      %p110 = scmp.ne.s32.totalorder %s98, %s99
      %p111 = scmp.eq.s32.totalorder %s26, 1
      %p112 = por %p110, %p111
      %p114 = scmp.ne.s32.totalorder %s99, %s113
      %p115 = scmp.eq.s32.totalorder %s26, 0
      %p116 = por %p114, %p115
      %s118 = sadd.s32 %s117, 1
      %p121 = scmp.eq.s32.totalorder %s20, 1
      %p122 = scmp.ne.s32.totalorder %s117, %s119
      %p123 = scmp.eq.s32.totalorder %s20, 0
      %p124 = por %p122, %p123
      %p125 = scmp.ne.s32.totalorder %s117, %s119
      %p126 = scmp.eq.s32.totalorder %s25, 1
      %p127 = por %p125, %p126
      %p128 = scmp.ne.s32.totalorder %s119, %s120
      %p129 = scmp.eq.s32.totalorder %s25, 0
      %p130 = por %p128, %p129
      %p131 = scmp.ne.s32.totalorder %s119, %s120
      %p132 = scmp.eq.s32.totalorder %s26, 1
      %p133 = por %p131, %p132
      %p135 = scmp.ne.s32.totalorder %s120, %s134
      %p136 = scmp.eq.s32.totalorder %s26, 0
      %p137 = por %p135, %p136
      %s139 = sadd.s32 %s138, 1
      %p142 = scmp.eq.s32.totalorder %s20, 1
      %p143 = scmp.ne.s32.totalorder %s138, %s140
      %p144 = scmp.eq.s32.totalorder %s20, 0
      %p145 = por %p143, %p144
      %p146 = scmp.ne.s32.totalorder %s138, %s140
      %p147 = scmp.eq.s32.totalorder %s25, 1
      %p148 = por %p146, %p147
      %p149 = scmp.ne.s32.totalorder %s140, %s141
      %p150 = scmp.eq.s32.totalorder %s25, 0
      %p151 = por %p149, %p150
      %p152 = scmp.ne.s32.totalorder %s140, %s141
      %p153 = scmp.eq.s32.totalorder %s26, 1
      %p154 = por %p152, %p153
      %p156 = scmp.ne.s32.totalorder %s141, %s155
      %p157 = scmp.eq.s32.totalorder %s26, 0
      %p158 = por %p156, %p157
      %s160 = sadd.s32 %s159, 1
      %p163 = scmp.eq.s32.totalorder %s20, 1
      %p164 = scmp.ne.s32.totalorder %s159, %s161
      %p165 = scmp.eq.s32.totalorder %s20, 0
      %p166 = por %p164, %p165
      %p167 = scmp.ne.s32.totalorder %s159, %s161
      %p168 = scmp.eq.s32.totalorder %s25, 1
      %p169 = por %p167, %p168
      %p170 = scmp.ne.s32.totalorder %s161, %s162
      %p171 = scmp.eq.s32.totalorder %s25, 0
      %p172 = por %p170, %p171
      %p173 = scmp.ne.s32.totalorder %s161, %s162
      %p174 = scmp.eq.s32.totalorder %s26, 1
      %p175 = por %p173, %p174
      %p177 = scmp.ne.s32.totalorder %s162, %s176
      %p178 = scmp.eq.s32.totalorder %s26, 0
      %p179 = por %p177, %p178
      %s181 = sadd.s32 %s180, 1
      %p184 = scmp.eq.s32.totalorder %s20, 1
      %p185 = scmp.ne.s32.totalorder %s180, %s182
      %p186 = scmp.eq.s32.totalorder %s20, 0
      %p187 = por %p185, %p186
      %p188 = scmp.ne.s32.totalorder %s180, %s182
      %p189 = scmp.eq.s32.totalorder %s25, 1
      %p190 = por %p188, %p189
      %p191 = scmp.ne.s32.totalorder %s182, %s183
      %p192 = scmp.eq.s32.totalorder %s25, 0
      %p193 = por %p191, %p192
      %p194 = scmp.ne.s32.totalorder %s182, %s183
      %p195 = scmp.eq.s32.totalorder %s26, 1
      %p196 = por %p194, %p195
      %p198 = scmp.ne.s32.totalorder %s183, %s197
      %p199 = scmp.eq.s32.totalorder %s26, 0
      %p200 = por %p198, %p199
      %s202 = sadd.s32 %s201, 1
      %p205 = scmp.eq.s32.totalorder %s20, 1
      %p206 = scmp.ne.s32.totalorder %s201, %s203
      %p207 = scmp.eq.s32.totalorder %s20, 0
      %p208 = por %p206, %p207
      %p209 = scmp.ne.s32.totalorder %s201, %s203
      %p210 = scmp.eq.s32.totalorder %s25, 1
      %p211 = por %p209, %p210
      %p212 = scmp.ne.s32.totalorder %s203, %s204
      %p213 = scmp.eq.s32.totalorder %s25, 0
      %p214 = por %p212, %p213
      %p215 = scmp.ne.s32.totalorder %s203, %s204
      %p216 = scmp.eq.s32.totalorder %s26, 1
      %p217 = por %p215, %p216
      %p219 = scmp.ne.s32.totalorder %s204, %s218
      %p220 = scmp.eq.s32.totalorder %s26, 0
      %p221 = por %p219, %p220
      %s223 = sadd.s32 %s222, 1
      %p226 = scmp.eq.s32.totalorder %s20, 1
      %p227 = scmp.ne.s32.totalorder %s222, %s224
      %p228 = scmp.eq.s32.totalorder %s20, 0
      %p229 = por %p227, %p228
      %p230 = scmp.ne.s32.totalorder %s222, %s224
      %p231 = scmp.eq.s32.totalorder %s25, 1
      %p232 = por %p230, %p231
      %p233 = scmp.ne.s32.totalorder %s224, %s225
      %p234 = scmp.eq.s32.totalorder %s25, 0
      %p235 = por %p233, %p234
      %p236 = scmp.ne.s32.totalorder %s224, %s225
      %p237 = scmp.eq.s32.totalorder %s26, 1
      %p238 = por %p236, %p237
      %p240 = scmp.ne.s32.totalorder %s225, %s239
      %p241 = scmp.eq.s32.totalorder %s26, 0
      %p242 = por %p240, %p241
      %s244 = sadd.s32 %s243, 1
      %p247 = scmp.eq.s32.totalorder %s20, 1
      %p248 = scmp.ne.s32.totalorder %s243, %s245
      %p249 = scmp.eq.s32.totalorder %s20, 0
      %p250 = por %p248, %p249
      %p251 = scmp.ne.s32.totalorder %s243, %s245
      %p252 = scmp.eq.s32.totalorder %s25, 1
      %p253 = por %p251, %p252
      %p254 = scmp.ne.s32.totalorder %s245, %s246
      %p255 = scmp.eq.s32.totalorder %s25, 0
      %p256 = por %p254, %p255
      %p257 = scmp.ne.s32.totalorder %s245, %s246
      %p258 = scmp.eq.s32.totalorder %s26, 1
      %p259 = por %p257, %p258
      %p261 = scmp.ne.s32.totalorder %s246, %s260
      %p262 = scmp.eq.s32.totalorder %s26, 0
      %p263 = por %p261, %p262
      %s264 = ssub.s32 %s20, %s27
      %p265 = scmp.eq.s32.totalorder %s264, 0
      %s267 = sadd.s32 %s266, 1
      %s268 = scalar_select %p265, %s266, %s267
      %p271 = pneg %p265
      %p272 = scmp.eq.s32.totalorder %s20, 1
      %p273 = por %p271, %p272
      %p274 = scmp.ne.s32.totalorder %s266, %s269
      %p275 = scmp.eq.s32.totalorder %s20, 0
      %p276 = por %p274, %p275
      %p277 = scmp.ne.s32.totalorder %s266, %s269
      %p278 = scmp.eq.s32.totalorder %s25, 1
      %p279 = por %p277, %p278
      %p280 = scmp.ne.s32.totalorder %s269, %s270
      %p281 = scmp.eq.s32.totalorder %s25, 0
      %p282 = por %p280, %p281
      %p283 = scmp.ne.s32.totalorder %s269, %s270
      %p284 = scmp.eq.s32.totalorder %s26, 1
      %p285 = por %p283, %p284
      %p287 = scmp.ne.s32.totalorder %s270, %s286
      %p288 = scmp.eq.s32.totalorder %s26, 0
      %p289 = por %p287, %p288
      %p290 = scmp.le.s32.totalorder 1, %s20
      %p291 = scmp.lt.s32.totalorder %s20, 3
      %p292 = pnand %p290, %p291
      %p293 = pneg %p292
      // Predicated region
      $region9: #{tpu_custom_call.1} parent=5 // pred_check
        _
      $region10: #{tpu_custom_call.1} parent=5 // pred_check_branch
        %295 = sbr.rel (%p292) target = $region12
      $region11: #{tpu_custom_call.1} parent=5 // pred_region
        %s296 = ssub.s32 %s20, 1
        // Predicated region
        $region13: #{tpu_custom_call.1} parent=11 // pred_check
          %p297 = pneg %p67
        $region14: #{tpu_custom_call.1} parent=11 // pred_check_branch
          %299 = sbr.rel (%p297) target = $region16
        $region15: #{tpu_custom_call.1} parent=11 // pred_region
          _
        $region16: #{tpu_custom_call.1} parent=11 // pred_fallthru
          _
        // Predicated region
        $region17: #{tpu_custom_call.1} parent=11 // pred_check
          %p300 = pneg %p88
        $region18: #{tpu_custom_call.1} parent=11 // pred_check_branch
          %302 = sbr.rel (%p300) target = $region20
        $region19: #{tpu_custom_call.1} parent=11 // pred_region
          _
        $region20: #{tpu_custom_call.1} parent=11 // pred_fallthru
          _
        // Predicated region
        $region21: #{tpu_custom_call.1} parent=11 // pred_check
          %p303 = pneg %p109
        $region22: #{tpu_custom_call.1} parent=11 // pred_check_branch
          %305 = sbr.rel (%p303) target = $region24
        $region23: #{tpu_custom_call.1} parent=11 // pred_region
          _
        $region24: #{tpu_custom_call.1} parent=11 // pred_fallthru
          _
        // Predicated region
        $region25: #{tpu_custom_call.1} parent=11 // pred_check
          %p306 = pneg %p130
        $region26: #{tpu_custom_call.1} parent=11 // pred_check_branch
          %308 = sbr.rel (%p306) target = $region28
        $region27: #{tpu_custom_call.1} parent=11 // pred_region
          _
        $region28: #{tpu_custom_call.1} parent=11 // pred_fallthru
          _
        // Predicated region
        $region29: #{tpu_custom_call.1} parent=11 // pred_check
          %p309 = pneg %p151
        $region30: #{tpu_custom_call.1} parent=11 // pred_check_branch
          %311 = sbr.rel (%p309) target = $region32
        $region31: #{tpu_custom_call.1} parent=11 // pred_region
          _
        $region32: #{tpu_custom_call.1} parent=11 // pred_fallthru
          _
        // Predicated region
        $region33: #{tpu_custom_call.1} parent=11 // pred_check
          %p312 = pneg %p172
        $region34: #{tpu_custom_call.1} parent=11 // pred_check_branch
          %314 = sbr.rel (%p312) target = $region36
        $region35: #{tpu_custom_call.1} parent=11 // pred_region
          _
        $region36: #{tpu_custom_call.1} parent=11 // pred_fallthru
          _
        // Predicated region
        $region37: #{tpu_custom_call.1} parent=11 // pred_check
          %p315 = pneg %p193
        $region38: #{tpu_custom_call.1} parent=11 // pred_check_branch
          %317 = sbr.rel (%p315) target = $region40
        $region39: #{tpu_custom_call.1} parent=11 // pred_region
          _
        $region40: #{tpu_custom_call.1} parent=11 // pred_fallthru
          _
        // Predicated region
        $region41: #{tpu_custom_call.1} parent=11 // pred_check
          %p318 = pneg %p214
        $region42: #{tpu_custom_call.1} parent=11 // pred_check_branch
          %320 = sbr.rel (%p318) target = $region44
        $region43: #{tpu_custom_call.1} parent=11 // pred_region
          _
        $region44: #{tpu_custom_call.1} parent=11 // pred_fallthru
          _
        // Predicated region
        $region45: #{tpu_custom_call.1} parent=11 // pred_check
          %p321 = pneg %p235
        $region46: #{tpu_custom_call.1} parent=11 // pred_check_branch
          %323 = sbr.rel (%p321) target = $region48
        $region47: #{tpu_custom_call.1} parent=11 // pred_region
          _
        $region48: #{tpu_custom_call.1} parent=11 // pred_fallthru
          _
        // Predicated region
        $region49: #{tpu_custom_call.1} parent=11 // pred_check
          %p324 = pneg %p256
        $region50: #{tpu_custom_call.1} parent=11 // pred_check_branch
          %326 = sbr.rel (%p324) target = $region52
        $region51: #{tpu_custom_call.1} parent=11 // pred_region
          _
        $region52: #{tpu_custom_call.1} parent=11 // pred_fallthru
          _
      $region12: #{tpu_custom_call.1} parent=5 // pred_fallthru
        _
      %p327 = scmp.lt.s32.totalorder %s20, 2
      // Predicated region
      $region53: #{tpu_custom_call.1} parent=5 // pred_check
        %p328 = pneg %p327
      $region54: #{tpu_custom_call.1} parent=5 // pred_check_branch
        %330 = sbr.rel (%p328) target = $region56
      $region55: #{tpu_custom_call.1} parent=5 // pred_region
        // Predicated region
        $region57: #{tpu_custom_call.1} parent=55 // pred_check
          %p331 = pneg %p40
        $region58: #{tpu_custom_call.1} parent=55 // pred_check_branch
          %333 = sbr.rel (%p331) target = $region60
        $region59: #{tpu_custom_call.1} parent=55 // pred_region
          %p334 = scmp.lt.s32.totalorder %s20, 1
          %s335 = scalar_select %p334, %s20, 1
          %s336 = smul.addr %s335, 2
          %s337 = smul.addr %s336, 8
          %s338 = scalar_lea.vmem %s0, %s337
        $region60: #{tpu_custom_call.1} parent=55 // pred_fallthru
          _
      $region56: #{tpu_custom_call.1} parent=5 // pred_fallthru
        _
      %p339 = scmp.le.s32.totalorder 1, %s20
      %p340 = scmp.lt.s32.totalorder %s20, 3
      %p341 = pnand %p339, %p340
      %p342 = pneg %p341
      // Predicated region
      $region61: #{tpu_custom_call.1} parent=5 // pred_check
        _
      $region62: #{tpu_custom_call.1} parent=5 // pred_check_branch
        %344 = sbr.rel (%p341) target = $region64
      $region63: #{tpu_custom_call.1} parent=5 // pred_region
        %s345 = ssub.s32 %s20, 1
        %p346 = scmp.lt.s32.totalorder %s25, 1
        %s347 = scalar_select %p346, %s25, 1
        %s348 = smul.addr %s347, 2
        %s349 = smul.addr %s348, 8
        %s350 = scalar_lea.vmem %s0, %s349
        %p351 = pneg %p46
        %p352 = pneg %p43
        %p353 = pneg %p67
        %p354 = pneg %p64
        %p355 = pneg %p88
        %p356 = pneg %p85
        %p357 = pneg %p109
        %p358 = pneg %p106
        %p359 = pneg %p130
        %p360 = pneg %p127
        %p361 = pneg %p151
        %p362 = pneg %p148
        %p363 = pneg %p172
        %p364 = pneg %p169
        %p365 = pneg %p193
        %p366 = pneg %p190
        %p367 = pneg %p214
        %p368 = pneg %p211
        %p369 = pneg %p235
        %p370 = pneg %p232
        %p371 = pneg %p256
        %p372 = pneg %p253
        %p373 = pneg %p282
        %p374 = pneg %p279
        %s375 = sand.u32 %s269, 1
        %s376 = scalar_lea.sflag [#allocation4], %s375
        %s377 = sand.u32 %s269, 1
        %s378 = smul.addr %s377, 16
        %s379 = scalar_lea.vmem [#allocation3], %s378
        %p380 = scmp.lt.s32.totalorder %s25, 1
        %s381 = scalar_select %p380, %s25, 1
        %s382 = smul.addr %s381, 2
        %s383 = smul.addr %s382, 8
        %s384 = scalar_lea.vmem %s0, %s383
        %vm386 = vcmask 130048
        %387 = vst.msk [vmem:[#allocation2] sm:$0xff] %vm386, 0.0
        %388 = vst.msk [vmem:[#allocation2 + $0x8] sm:$0xff] %vm386, 0.0
        %v389 = vld [vmem:[%s384] sm:$0xff]
        %v390 = vld [vmem:[%s384 + $0x8] sm:$0xff]
        %v391 = vpack.c.bf16 %v389, %v389
        %v392 = vpack.c.bf16 %v390, %v390
        %v393 = vld [vmem:[%s1] sm:$0xf]
        %v394 = vld [vmem:[%s1 + $0x4] sm:$0xf]
        %v395 = vld [vmem:[%s1 + $0x8] sm:$0xf]
        %v396 = vld [vmem:[%s1 + $0xc] sm:$0xf]
        %v397 = vld [vmem:[%s2] sm:$0xff]
        %v398 = vld [vmem:[%s2 + $0x8] sm:$0xff]
        %v399 = vld [vmem:[%s2 + $0x10] sm:$0xff]
        %v400 = vld [vmem:[%s2 + $0x18] sm:$0xff]
        %402 = vset.pattern.permute.xlu0 0
        %403 = vperm.xlu0 %402, %v397
        %v404 = vpop.permute.xlu0 %403
        %407 = vset.pattern.permute.xlu0 0
        %408 = vperm.xlu0 %407, %v398
        %v409 = vpop.permute.xlu0 %408
        %412 = vset.pattern.permute.xlu0 0
        %413 = vperm.xlu0 %412, %v399
        %v414 = vpop.permute.xlu0 %413
        %417 = vset.pattern.permute.xlu0 0
        %418 = vperm.xlu0 %417, %v400
        %v419 = vpop.permute.xlu0 %418
        %v425 = vunpack.c.l.b16 %v393
        %v426 = vunpack.c.l.b16 %v394
        %v427 = vunpack.c.l.b16 %v395
        %v428 = vunpack.c.l.b16 %v396
        %v429 = vpack.c.b16 %v426, %v425
        %v430 = vpack.c.b16 %v428, %v427
        %vm431 = vcmask 64512
        %v433 = vsel %vm431, %v429, 0
        %v436 = vsel %vm431, %v430, 0
        %vm438 = vcmask 1043456
        %v440 = vsel %vm438, %v391, 0
        %v443 = vsel %vm438, %v392, 0
        %445 = vmatprep.subr.bf16.mxu0 %v443
        %446 = vmatpush1.bf16.msra.mxu0 %v440
        %447 = vmatprep.subr.bf16.mxu0 0
        %448 = vmatpush1.bf16.msra.mxu0 0
        %449 = vmatprep.subr.bf16.mxu0 0
        %450 = vmatpush1.bf16.msra.mxu0 0
        %451 = vmatprep.subr.bf16.mxu0 0
        %452 = vmatpush1.bf16.msra.mxu0 0
        %453 = vmatprep.subr.bf16.mxu0 0
        %454 = vmatpush1.bf16.msra.mxu0 0
        %455 = vmatprep.subr.bf16.mxu0 0
        %456 = vmatpush1.bf16.msra.mxu0 0
        %457 = vmatprep.subr.bf16.mxu0 0
        %458 = vmatpush1.bf16.msra.mxu0 0
        %459 = vmatprep.subr.bf16.mxu0 0
        %460 = vmatpush1.bf16.msra.mxu0 0
        %461 = vmatprep.subr.bf16.mxu0 0
        %462 = vmatpush1.bf16.msra.mxu0 0
        %463 = vmatprep.subr.bf16.mxu0 0
        %464 = vmatpush1.bf16.msra.mxu0 0
        %465 = vmatprep.subr.bf16.mxu0 0
        %466 = vmatpush1.bf16.msra.mxu0 0
        %467 = vmatprep.subr.bf16.mxu0 0
        %468 = vmatpush1.bf16.msra.mxu0 0
        %469 = vmatprep.subr.bf16.mxu0 0
        %470 = vmatpush1.bf16.msra.mxu0 0
        %471 = vmatprep.subr.bf16.mxu0 0
        %472 = vmatpush1.bf16.msra.mxu0 0
        %473 = vmatprep.subr.bf16.mxu0 0
        %474 = vmatpush1.bf16.msra.mxu0 0
        %475 = vmatprep.subr.bf16.mxu0 0
        %476 = vmatpush1.bf16.msra.mxu0 0
        %477 = vmatprep.mubr.bf16.mxu0 0
        %478 = vmatmul.mubr.bf16.gmra.mrb[0].mxu0 %v433
        %v479 = vpop.f32.mrb[0].mxu0
        %v480 = vadd.f32 %v404, %v479
        %v481 = vpop.f32.mrb[0].mxu0
        %v482 = vadd.f32 %v404, %v481
        %v483 = vpop.f32.mrb[0].mxu0
        %v484 = vadd.f32 %v409, %v483
        %v485 = vpop.f32.mrb[0].mxu0
        %v486 = vadd.f32 %v409, %v485
        %487 = vmatprep.mubr.bf16.mxu0 0
        %488 = vmatmul.mubr.bf16.gmra.mrb[0].mxu0 %v436
        %v489 = vpop.f32.mrb[0].mxu0
        %v490 = vadd.f32 %v414, %v489
        %v491 = vpop.f32.mrb[0].mxu0
        %v492 = vadd.f32 %v414, %v491
        %v493 = vpop.f32.mrb[0].mxu0
        %v494 = vadd.f32 %v419, %v493
        %v495 = vpop.f32.mrb[0].mxu0
        %v496 = vadd.f32 %v419, %v495
        %497 = vdwg.mxu0
        %v498 = vpack.c.bf16 %v484, %v480
        %v499 = vpack.c.bf16 %v486, %v482
        %v500 = vpack.c.bf16 %v494, %v490
        %v501 = vpack.c.bf16 %v496, %v492
        %v502 = vld [vmem:[#allocation2] sm:$0xff]
        %v503 = vld [vmem:[#allocation2 + $0x8] sm:$0xff]
        %504 = vmatprep.subr.bf16.mxu0 %v501
        %505 = vmatpush1.bf16.xpose.msra.mxu0 %v500
        %506 = vmatprep.subr.bf16.mxu0 0
        %507 = vmatpush1.bf16.xpose.msra.mxu0 0
        %508 = vmatprep.subr.bf16.mxu0 0
        %509 = vmatpush1.bf16.xpose.msra.mxu0 0
        %510 = vmatprep.subr.bf16.mxu0 0
        %511 = vmatpush1.bf16.xpose.msra.mxu0 0
        %512 = vmatprep.subr.bf16.mxu0 0
        %513 = vmatpush1.bf16.xpose.msra.mxu0 0
        %514 = vmatprep.subr.bf16.mxu0 0
        %515 = vmatpush1.bf16.xpose.msra.mxu0 0
        %516 = vmatprep.subr.bf16.mxu0 0
        %517 = vmatpush1.bf16.xpose.msra.mxu0 0
        %518 = vmatprep.subr.bf16.mxu0 0
        %519 = vmatpush1.bf16.xpose.msra.mxu0 0
        %520 = vmatprep.subr.bf16.mxu0 0
        %521 = vmatpush1.bf16.xpose.msra.mxu0 0
        %522 = vmatprep.subr.bf16.mxu0 0
        %523 = vmatpush1.bf16.xpose.msra.mxu0 0
        %524 = vmatprep.subr.bf16.mxu0 0
        %525 = vmatpush1.bf16.xpose.msra.mxu0 0
        %526 = vmatprep.subr.bf16.mxu0 0
        %527 = vmatpush1.bf16.xpose.msra.mxu0 0
        %528 = vmatprep.subr.bf16.mxu0 0
        %529 = vmatpush1.bf16.xpose.msra.mxu0 0
        %530 = vmatprep.subr.bf16.mxu0 0
        %531 = vmatpush1.bf16.xpose.msra.mxu0 0
        %532 = vmatprep.subr.bf16.mxu0 0
        %533 = vmatpush1.bf16.xpose.msra.mxu0 0
        %534 = vmatprep.subr.bf16.mxu0 0
        %535 = vmatpush1.bf16.xpose.msra.mxu0 0
        %536 = vmatprep.mubr.bf16.mxu0 %v499
        %537 = vmatmul.mubr.bf16.gmra.mrb[0].mxu0 %v498
        %v538 = vpop.f32.mrb[0].mxu0
        %v539 = vadd.f32 0.0, %v538
        %v540 = vpop.f32.mrb[0].mxu0
        %v541 = vpop.f32.mrb[0].mxu0
        %v542 = vadd.f32 0.0, %v541
        %v543 = vpop.f32.mrb[0].mxu0
        %544 = vdwg.mxu0
        %v545 = vadd.f32 %v502, %v539
        %v546 = vadd.f32 %v503, %v542
        %547 = vst.msk [vmem:[#allocation2] sm:$0xff] %vm386, %v545
        %548 = vst.msk [vmem:[#allocation2 + $0x8] sm:$0xff] %vm386, %v546
        %v549 = vld [vmem:[#allocation2] sm:$0xff]
        %v550 = vld [vmem:[#allocation2 + $0x8] sm:$0xff]
        %v551 = vld [vmem:[%s3] sm:$0xff]
        %v552 = vld [vmem:[%s3 + $0x8] sm:$0xff]
        %v553 = vsub.f32 %v549, %v551
        %v554 = vsub.f32 %v550, %v552
        %v555 = vmul.f32 %v553, 0.00390625
        %v556 = vmul.f32 %v554, 0.00390625
        %v557 = vld [vmem:[%s4] sm:$0xff]
        %v558 = vld [vmem:[%s4 + $0x8] sm:$0xff]
        %v559 = vld [vmem:[%s5] sm:$0x1]
        %v561 = vlaneseq
        %v562 = vshrl.u32 %v561, 7
        %v563 = vsub.s32 0, %v562
        %v564 = vrot.slane %v559, %v563
        %v567 = vsel %vm386, %v555, 0
        %v570 = vsel %vm386, %v556, 0
        %v573 = vsel %vm386, %v557, 0
        %v576 = vsel %vm386, %v558, 0
        %578 = vmatprep.subr.mxu0 0.0
        %579 = vmatpush1.xpose.msra.mxu0 %v573
        %580 = vmatprep.subr.mxu0 0.0
        %581 = vmatpush1.xpose.msra.mxu0 %v576
        %582 = vmatprep.subr.mxu0 0.0
        %583 = vmatpush1.xpose.msra.mxu0 0.0
        %584 = vmatprep.subr.mxu0 0.0
        %585 = vmatpush1.xpose.msra.mxu0 0.0
        %586 = vmatprep.subr.mxu0 0.0
        %587 = vmatpush1.xpose.msra.mxu0 0.0
        %588 = vmatprep.subr.mxu0 0.0
        %589 = vmatpush1.xpose.msra.mxu0 0.0
        %590 = vmatprep.subr.mxu0 0.0
        %591 = vmatpush1.xpose.msra.mxu0 0.0
        %592 = vmatprep.subr.mxu0 0.0
        %593 = vmatpush1.xpose.msra.mxu0 0.0
        %594 = vmatprep.subr.mxu0 0.0
        %595 = vmatpush1.xpose.msra.mxu0 0.0
        %596 = vmatprep.subr.mxu0 0.0
        %597 = vmatpush1.xpose.msra.mxu0 0.0
        %598 = vmatprep.subr.mxu0 0.0
        %599 = vmatpush1.xpose.msra.mxu0 0.0
        %600 = vmatprep.subr.mxu0 0.0
        %601 = vmatpush1.xpose.msra.mxu0 0.0
        %602 = vmatprep.subr.mxu0 0.0
        %603 = vmatpush1.xpose.msra.mxu0 0.0
        %604 = vmatprep.subr.mxu0 0.0
        %605 = vmatpush1.xpose.msra.mxu0 0.0
        %606 = vmatprep.subr.mxu0 0.0
        %607 = vmatpush1.xpose.msra.mxu0 0.0
        %608 = vmatprep.subr.mxu0 0.0
        %609 = vmatpush1.xpose.msra.mxu0 0.0
        %610 = vmatprep.subr.mxu0 0.0
        %611 = vmatpush1.xpose.msra.mxu0 0.0
        %612 = vmatprep.subr.mxu0 0.0
        %613 = vmatpush1.xpose.msra.mxu0 0.0
        %614 = vmatprep.subr.mxu0 0.0
        %615 = vmatpush1.xpose.msra.mxu0 0.0
        %616 = vmatprep.subr.mxu0 0.0
        %617 = vmatpush1.xpose.msra.mxu0 0.0
        %618 = vmatprep.subr.mxu0 0.0
        %619 = vmatpush1.xpose.msra.mxu0 0.0
        %620 = vmatprep.subr.mxu0 0.0
        %621 = vmatpush1.xpose.msra.mxu0 0.0
        %622 = vmatprep.subr.mxu0 0.0
        %623 = vmatpush1.xpose.msra.mxu0 0.0
        %624 = vmatprep.subr.mxu0 0.0
        %625 = vmatpush1.xpose.msra.mxu0 0.0
        %626 = vmatprep.subr.mxu0 0.0
        %627 = vmatpush1.xpose.msra.mxu0 0.0
        %628 = vmatprep.subr.mxu0 0.0
        %629 = vmatpush1.xpose.msra.mxu0 0.0
        %630 = vmatprep.subr.mxu0 0.0
        %631 = vmatpush1.xpose.msra.mxu0 0.0
        %632 = vmatprep.subr.mxu0 0.0
        %633 = vmatpush1.xpose.msra.mxu0 0.0
        %634 = vmatprep.subr.mxu0 0.0
        %635 = vmatpush1.xpose.msra.mxu0 0.0
        %636 = vmatprep.subr.mxu0 0.0
        %637 = vmatpush1.xpose.msra.mxu0 0.0
        %638 = vmatprep.subr.mxu0 0.0
        %639 = vmatpush1.xpose.msra.mxu0 0.0
        %640 = vmatprep.subr.mxu0 0.0
        %641 = vmatpush1.xpose.msra.mxu0 0.0
        %642 = vmatprep.mubr.f32.mxu0 0.0
        %643 = vmatmul.mubr.f32.gmra.mrb[0].mxu0 %v567
        %v644 = vpop.f32.mrb[0].mxu0
        %v645 = vadd.f32 %v564, %v644
        %v646 = vpop.f32.mrb[0].mxu0
        %647 = vmatprep.mubr.f32.mxu0 0.0
        %648 = vmatmul.mubr.f32.gmra.mrb[0].mxu0 %v570
        %v649 = vpop.f32.mrb[0].mxu0
        %v650 = vadd.f32 %v564, %v649
        %v651 = vpop.f32.mrb[0].mxu0
        %652 = vdwg.mxu0
        %v653 = vadd.f32 %v645, %v555
        %v654 = vadd.f32 %v650, %v556
        %v655 = vmax.f32 %v653, 0.0
        %v656 = vmax.f32 %v654, 0.0
        %v657 = vld [vmem:[%s6] sm:$0xff]
        %v658 = vld [vmem:[%s6 + $0x8] sm:$0xff]
        %v660 = vsel %vm386, %v657, 0
        %v663 = vsel %vm386, %v658, 0
        %665 = vmatprep.subr.mxu0 0.0
        %666 = vmatpush1.msra.mxu0 %v655
        %667 = vmatprep.subr.mxu0 0.0
        %668 = vmatpush1.msra.mxu0 %v656
        %669 = vmatprep.subr.mxu0 0.0
        %670 = vmatpush1.msra.mxu0 0.0
        %671 = vmatprep.subr.mxu0 0.0
        %672 = vmatpush1.msra.mxu0 0.0
        %673 = vmatprep.subr.mxu0 0.0
        %674 = vmatpush1.msra.mxu0 0.0
        %675 = vmatprep.subr.mxu0 0.0
        %676 = vmatpush1.msra.mxu0 0.0
        %677 = vmatprep.subr.mxu0 0.0
        %678 = vmatpush1.msra.mxu0 0.0
        %679 = vmatprep.subr.mxu0 0.0
        %680 = vmatpush1.msra.mxu0 0.0
        %681 = vmatprep.subr.mxu0 0.0
        %682 = vmatpush1.msra.mxu0 0.0
        %683 = vmatprep.subr.mxu0 0.0
        %684 = vmatpush1.msra.mxu0 0.0
        %685 = vmatprep.subr.mxu0 0.0
        %686 = vmatpush1.msra.mxu0 0.0
        %687 = vmatprep.subr.mxu0 0.0
        %688 = vmatpush1.msra.mxu0 0.0
        %689 = vmatprep.subr.mxu0 0.0
        %690 = vmatpush1.msra.mxu0 0.0
        %691 = vmatprep.subr.mxu0 0.0
        %692 = vmatpush1.msra.mxu0 0.0
        %693 = vmatprep.subr.mxu0 0.0
        %694 = vmatpush1.msra.mxu0 0.0
        %695 = vmatprep.subr.mxu0 0.0
        %696 = vmatpush1.msra.mxu0 0.0
        %697 = vmatprep.subr.mxu0 0.0
        %698 = vmatpush1.msra.mxu0 0.0
        %699 = vmatprep.subr.mxu0 0.0
        %700 = vmatpush1.msra.mxu0 0.0
        %701 = vmatprep.subr.mxu0 0.0
        %702 = vmatpush1.msra.mxu0 0.0
        %703 = vmatprep.subr.mxu0 0.0
        %704 = vmatpush1.msra.mxu0 0.0
        %705 = vmatprep.subr.mxu0 0.0
        %706 = vmatpush1.msra.mxu0 0.0
        %707 = vmatprep.subr.mxu0 0.0
        %708 = vmatpush1.msra.mxu0 0.0
        %709 = vmatprep.subr.mxu0 0.0
        %710 = vmatpush1.msra.mxu0 0.0
        %711 = vmatprep.subr.mxu0 0.0
        %712 = vmatpush1.msra.mxu0 0.0
        %713 = vmatprep.subr.mxu0 0.0
        %714 = vmatpush1.msra.mxu0 0.0
        %715 = vmatprep.subr.mxu0 0.0
        %716 = vmatpush1.msra.mxu0 0.0
        %717 = vmatprep.subr.mxu0 0.0
        %718 = vmatpush1.msra.mxu0 0.0
        %719 = vmatprep.subr.mxu0 0.0
        %720 = vmatpush1.msra.mxu0 0.0
        %721 = vmatprep.subr.mxu0 0.0
        %722 = vmatpush1.msra.mxu0 0.0
        %723 = vmatprep.subr.mxu0 0.0
        %724 = vmatpush1.msra.mxu0 0.0
        %725 = vmatprep.subr.mxu0 0.0
        %726 = vmatpush1.msra.mxu0 0.0
        %727 = vmatprep.subr.mxu0 0.0
        %728 = vmatpush1.msra.mxu0 0.0
        %729 = vmatprep.mubr.f32.mxu0 0.0
        %730 = vmatmul.mubr.f32.gmra.mrb[0].mxu0 %v660
        %v731 = vpop.f32.mrb[0].mxu0
        %v732 = vadd.f32 0.0, %v731
        %v733 = vpop.f32.mrb[0].mxu0
        %734 = vmatprep.mubr.f32.mxu0 0.0
        %735 = vmatmul.mubr.f32.gmra.mrb[0].mxu0 %v663
        %v736 = vpop.f32.mrb[0].mxu0
        %v737 = vadd.f32 0.0, %v736
        %v738 = vpop.f32.mrb[0].mxu0
        %739 = vdwg.mxu0
        %v740 = vld [vmem:[%s7] sm:$0xff]
        %v742 = vsel %vm386, %v740, 0
        %744 = vmatprep.subr.mxu0 0.0
        %745 = vmatpush1.msra.mxu0 %v732
        %746 = vmatprep.subr.mxu0 0.0
        %747 = vmatpush1.msra.mxu0 %v737
        %748 = vmatprep.subr.mxu0 0.0
        %749 = vmatpush1.msra.mxu0 0.0
        %750 = vmatprep.subr.mxu0 0.0
        %751 = vmatpush1.msra.mxu0 0.0
        %752 = vmatprep.subr.mxu0 0.0
        %753 = vmatpush1.msra.mxu0 0.0
        %754 = vmatprep.subr.mxu0 0.0
        %755 = vmatpush1.msra.mxu0 0.0
        %756 = vmatprep.subr.mxu0 0.0
        %757 = vmatpush1.msra.mxu0 0.0
        %758 = vmatprep.subr.mxu0 0.0
        %759 = vmatpush1.msra.mxu0 0.0
        %760 = vmatprep.subr.mxu0 0.0
        %761 = vmatpush1.msra.mxu0 0.0
        %762 = vmatprep.subr.mxu0 0.0
        %763 = vmatpush1.msra.mxu0 0.0
        %764 = vmatprep.subr.mxu0 0.0
        %765 = vmatpush1.msra.mxu0 0.0
        %766 = vmatprep.subr.mxu0 0.0
        %767 = vmatpush1.msra.mxu0 0.0
        %768 = vmatprep.subr.mxu0 0.0
        %769 = vmatpush1.msra.mxu0 0.0
        %770 = vmatprep.subr.mxu0 0.0
        %771 = vmatpush1.msra.mxu0 0.0
        %772 = vmatprep.subr.mxu0 0.0
        %773 = vmatpush1.msra.mxu0 0.0
        %774 = vmatprep.subr.mxu0 0.0
        %775 = vmatpush1.msra.mxu0 0.0
        %776 = vmatprep.subr.mxu0 0.0
        %777 = vmatpush1.msra.mxu0 0.0
        %778 = vmatprep.subr.mxu0 0.0
        %779 = vmatpush1.msra.mxu0 0.0
        %780 = vmatprep.subr.mxu0 0.0
        %781 = vmatpush1.msra.mxu0 0.0
        %782 = vmatprep.subr.mxu0 0.0
        %783 = vmatpush1.msra.mxu0 0.0
        %784 = vmatprep.subr.mxu0 0.0
        %785 = vmatpush1.msra.mxu0 0.0
        %786 = vmatprep.subr.mxu0 0.0
        %787 = vmatpush1.msra.mxu0 0.0
        %788 = vmatprep.subr.mxu0 0.0
        %789 = vmatpush1.msra.mxu0 0.0
        %790 = vmatprep.subr.mxu0 0.0
        %791 = vmatpush1.msra.mxu0 0.0
        %792 = vmatprep.subr.mxu0 0.0
        %793 = vmatpush1.msra.mxu0 0.0
        %794 = vmatprep.subr.mxu0 0.0
        %795 = vmatpush1.msra.mxu0 0.0
        %796 = vmatprep.subr.mxu0 0.0
        %797 = vmatpush1.msra.mxu0 0.0
        %798 = vmatprep.subr.mxu0 0.0
        %799 = vmatpush1.msra.mxu0 0.0
        %800 = vmatprep.subr.mxu0 0.0
        %801 = vmatpush1.msra.mxu0 0.0
        %802 = vmatprep.subr.mxu0 0.0
        %803 = vmatpush1.msra.mxu0 0.0
        %804 = vmatprep.subr.mxu0 0.0
        %805 = vmatpush1.msra.mxu0 0.0
        %806 = vmatprep.subr.mxu0 0.0
        %807 = vmatpush1.msra.mxu0 0.0
        %808 = vmatprep.mubr.f32.mxu0 0.0
        %809 = vmatmul.mubr.f32.gmra.mrb[0].mxu0 %v742
        %v810 = vpop.f32.mrb[0].mxu0
        %v811 = vadd.f32 0.0, %v810
        %v812 = vpop.f32.mrb[0].mxu0
        %813 = vdwg.mxu0
        %v814 = vld [vmem:[%s8] sm:$0xff]
        %v815 = vld [vmem:[%s8 + $0x8] sm:$0xff]
        %v817 = vsel %vm386, %v811, 0
        %819 = vmatprep.subr.mxu0 0.0
        %820 = vmatpush1.msra.mxu0 %v814
        %821 = vmatprep.subr.mxu0 0.0
        %822 = vmatpush1.msra.mxu0 %v815
        %823 = vmatprep.subr.mxu0 0.0
        %824 = vmatpush1.msra.mxu0 0.0
        %825 = vmatprep.subr.mxu0 0.0
        %826 = vmatpush1.msra.mxu0 0.0
        %827 = vmatprep.subr.mxu0 0.0
        %828 = vmatpush1.msra.mxu0 0.0
        %829 = vmatprep.subr.mxu0 0.0
        %830 = vmatpush1.msra.mxu0 0.0
        %831 = vmatprep.subr.mxu0 0.0
        %832 = vmatpush1.msra.mxu0 0.0
        %833 = vmatprep.subr.mxu0 0.0
        %834 = vmatpush1.msra.mxu0 0.0
        %835 = vmatprep.subr.mxu0 0.0
        %836 = vmatpush1.msra.mxu0 0.0
        %837 = vmatprep.subr.mxu0 0.0
        %838 = vmatpush1.msra.mxu0 0.0
        %839 = vmatprep.subr.mxu0 0.0
        %840 = vmatpush1.msra.mxu0 0.0
        %841 = vmatprep.subr.mxu0 0.0
        %842 = vmatpush1.msra.mxu0 0.0
        %843 = vmatprep.subr.mxu0 0.0
        %844 = vmatpush1.msra.mxu0 0.0
        %845 = vmatprep.subr.mxu0 0.0
        %846 = vmatpush1.msra.mxu0 0.0
        %847 = vmatprep.subr.mxu0 0.0
        %848 = vmatpush1.msra.mxu0 0.0
        %849 = vmatprep.subr.mxu0 0.0
        %850 = vmatpush1.msra.mxu0 0.0
        %851 = vmatprep.subr.mxu0 0.0
        %852 = vmatpush1.msra.mxu0 0.0
        %853 = vmatprep.subr.mxu0 0.0
        %854 = vmatpush1.msra.mxu0 0.0
        %855 = vmatprep.subr.mxu0 0.0
        %856 = vmatpush1.msra.mxu0 0.0
        %857 = vmatprep.subr.mxu0 0.0
        %858 = vmatpush1.msra.mxu0 0.0
        %859 = vmatprep.subr.mxu0 0.0
        %860 = vmatpush1.msra.mxu0 0.0
        %861 = vmatprep.subr.mxu0 0.0
        %862 = vmatpush1.msra.mxu0 0.0
        %863 = vmatprep.subr.mxu0 0.0
        %864 = vmatpush1.msra.mxu0 0.0
        %865 = vmatprep.subr.mxu0 0.0
        %866 = vmatpush1.msra.mxu0 0.0
        %867 = vmatprep.subr.mxu0 0.0
        %868 = vmatpush1.msra.mxu0 0.0
        %869 = vmatprep.subr.mxu0 0.0
        %870 = vmatpush1.msra.mxu0 0.0
        %871 = vmatprep.subr.mxu0 0.0
        %872 = vmatpush1.msra.mxu0 0.0
        %873 = vmatprep.subr.mxu0 0.0
        %874 = vmatpush1.msra.mxu0 0.0
        %875 = vmatprep.subr.mxu0 0.0
        %876 = vmatpush1.msra.mxu0 0.0
        %877 = vmatprep.subr.mxu0 0.0
        %878 = vmatpush1.msra.mxu0 0.0
        %879 = vmatprep.subr.mxu0 0.0
        %880 = vmatpush1.msra.mxu0 0.0
        %881 = vmatprep.subr.mxu0 0.0
        %882 = vmatpush1.msra.mxu0 0.0
        %883 = vmatprep.mubr.f32.mxu0 0.0
        %884 = vmatmul.mubr.f32.gmra.mrb[0].mxu0 %v817
        %v885 = vpop.f32.mrb[0].mxu0
        %v886 = vadd.f32 0.0, %v885
        %v887 = vpop.f32.mrb[0].mxu0
        %888 = vdwg.mxu0
        %v889 = vld [vmem:[%s9] sm:$0xff]
        %v890 = vld [vmem:[%s9 + $0x8] sm:$0xff]
        %v891 = vld [vmem:[%s10] sm:$0xff]
        %892 = vmatprep.subr.mxu0 0.0
        %893 = vmatpush1.msra.mxu0 %v889
        %894 = vmatprep.subr.mxu0 0.0
        %895 = vmatpush1.msra.mxu0 %v890
        %896 = vmatprep.subr.mxu0 0.0
        %897 = vmatpush1.msra.mxu0 0.0
        %898 = vmatprep.subr.mxu0 0.0
        %899 = vmatpush1.msra.mxu0 0.0
        %900 = vmatprep.subr.mxu0 0.0
        %901 = vmatpush1.msra.mxu0 0.0
        %902 = vmatprep.subr.mxu0 0.0
        %903 = vmatpush1.msra.mxu0 0.0
        %904 = vmatprep.subr.mxu0 0.0
        %905 = vmatpush1.msra.mxu0 0.0
        %906 = vmatprep.subr.mxu0 0.0
        %907 = vmatpush1.msra.mxu0 0.0
        %908 = vmatprep.subr.mxu0 0.0
        %909 = vmatpush1.msra.mxu0 0.0
        %910 = vmatprep.subr.mxu0 0.0
        %911 = vmatpush1.msra.mxu0 0.0
        %912 = vmatprep.subr.mxu0 0.0
        %913 = vmatpush1.msra.mxu0 0.0
        %914 = vmatprep.subr.mxu0 0.0
        %915 = vmatpush1.msra.mxu0 0.0
        %916 = vmatprep.subr.mxu0 0.0
        %917 = vmatpush1.msra.mxu0 0.0
        %918 = vmatprep.subr.mxu0 0.0
        %919 = vmatpush1.msra.mxu0 0.0
        %920 = vmatprep.subr.mxu0 0.0
        %921 = vmatpush1.msra.mxu0 0.0
        %922 = vmatprep.subr.mxu0 0.0
        %923 = vmatpush1.msra.mxu0 0.0
        %924 = vmatprep.subr.mxu0 0.0
        %925 = vmatpush1.msra.mxu0 0.0
        %926 = vmatprep.subr.mxu0 0.0
        %927 = vmatpush1.msra.mxu0 0.0
        %928 = vmatprep.subr.mxu0 0.0
        %929 = vmatpush1.msra.mxu0 0.0
        %930 = vmatprep.subr.mxu0 0.0
        %931 = vmatpush1.msra.mxu0 0.0
        %932 = vmatprep.subr.mxu0 0.0
        %933 = vmatpush1.msra.mxu0 0.0
        %934 = vmatprep.subr.mxu0 0.0
        %935 = vmatpush1.msra.mxu0 0.0
        %936 = vmatprep.subr.mxu0 0.0
        %937 = vmatpush1.msra.mxu0 0.0
        %938 = vmatprep.subr.mxu0 0.0
        %939 = vmatpush1.msra.mxu0 0.0
        %940 = vmatprep.subr.mxu0 0.0
        %941 = vmatpush1.msra.mxu0 0.0
        %942 = vmatprep.subr.mxu0 0.0
        %943 = vmatpush1.msra.mxu0 0.0
        %944 = vmatprep.subr.mxu0 0.0
        %945 = vmatpush1.msra.mxu0 0.0
        %946 = vmatprep.subr.mxu0 0.0
        %947 = vmatpush1.msra.mxu0 0.0
        %948 = vmatprep.subr.mxu0 0.0
        %949 = vmatpush1.msra.mxu0 0.0
        %950 = vmatprep.subr.mxu0 0.0
        %951 = vmatpush1.msra.mxu0 0.0
        %952 = vmatprep.subr.mxu0 0.0
        %953 = vmatpush1.msra.mxu0 0.0
        %954 = vmatprep.subr.mxu0 0.0
        %955 = vmatpush1.msra.mxu0 0.0
        %956 = vmatprep.mubr.f32.mxu0 0.0
        %957 = vmatmul.mubr.f32.gmra.mrb[0].mxu0 %v817
        %v958 = vpop.f32.mrb[0].mxu0
        %v959 = vadd.f32 %v891, %v958
        %v960 = vpop.f32.mrb[0].mxu0
        %961 = vdwg.mxu0
        %v962 = vpack.c.bf16 %v886, %v886
        %v963 = vld [vmem:[%s384] sm:$0xff]
        %v964 = vld [vmem:[%s384 + $0x8] sm:$0xff]
        %v965 = vpack.c.bf16 %v963, %v963
        %v966 = vpack.c.bf16 %v964, %v964
        %v968 = vsel %vm431, %v962, 0
        %v971 = vsel %vm438, %v965, 0
        %v974 = vsel %vm438, %v966, 0
        %976 = vmatprep.subr.bf16.mxu0 %v974
        %977 = vmatpush1.bf16.msra.mxu0 %v971
        %978 = vmatprep.subr.bf16.mxu0 0
        %979 = vmatpush1.bf16.msra.mxu0 0
        %980 = vmatprep.subr.bf16.mxu0 0
        %981 = vmatpush1.bf16.msra.mxu0 0
        %982 = vmatprep.subr.bf16.mxu0 0
        %983 = vmatpush1.bf16.msra.mxu0 0
        %984 = vmatprep.subr.bf16.mxu0 0
        %985 = vmatpush1.bf16.msra.mxu0 0
        %986 = vmatprep.subr.bf16.mxu0 0
        %987 = vmatpush1.bf16.msra.mxu0 0
        %988 = vmatprep.subr.bf16.mxu0 0
        %989 = vmatpush1.bf16.msra.mxu0 0
        %990 = vmatprep.subr.bf16.mxu0 0
        %991 = vmatpush1.bf16.msra.mxu0 0
        %992 = vmatprep.subr.bf16.mxu0 0
        %993 = vmatpush1.bf16.msra.mxu0 0
        %994 = vmatprep.subr.bf16.mxu0 0
        %995 = vmatpush1.bf16.msra.mxu0 0
        %996 = vmatprep.subr.bf16.mxu0 0
        %997 = vmatpush1.bf16.msra.mxu0 0
        %998 = vmatprep.subr.bf16.mxu0 0
        %999 = vmatpush1.bf16.msra.mxu0 0
        %1000 = vmatprep.subr.bf16.mxu0 0
        %1001 = vmatpush1.bf16.msra.mxu0 0
        %1002 = vmatprep.subr.bf16.mxu0 0
        %1003 = vmatpush1.bf16.msra.mxu0 0
        %1004 = vmatprep.subr.bf16.mxu0 0
        %1005 = vmatpush1.bf16.msra.mxu0 0
        %1006 = vmatprep.subr.bf16.mxu0 0
        %1007 = vmatpush1.bf16.msra.mxu0 0
        %1008 = vmatprep.mubr.bf16.mxu0 0
        %1009 = vmatmul.mubr.bf16.gmra.mrb[0].mxu0 %v968
        %v1010 = vpop.f32.mrb[0].mxu0
        %v1011 = vadd.f32 0.0, %v1010
        %v1012 = vpop.f32.mrb[0].mxu0
        %v1013 = vadd.f32 0.0, %v1012
        %v1014 = vpop.f32.mrb[0].mxu0
        %v1015 = vpop.f32.mrb[0].mxu0
        %1016 = vdwg.mxu0
        %v1017 = vadd.f32 %v963, %v1011
        %v1018 = vadd.f32 %v964, %v1013
        %1020 = vset.pattern.permute.xlu0 0
        %1021 = vperm.xlu0 %1020, %v959
        %v1022 = vpop.permute.xlu0 %1021
        %v1024 = vadd.f32 %v1017, %v1022
        %v1025 = vadd.f32 %v1018, %v1022
        %1026 = vst [vmem:[%s379] sm:$0xff] %v1024
        %1027 = vst [vmem:[%s379 + $0x8] sm:$0xff] %v1025
        %s1028 = sand.u32 %s269, 1
        %s1029 = scalar_lea.sflag [#allocation4], %s1028
        %s1030 = sand.u32 %s269, 1
        %s1031 = smul.addr %s1030, 16
        %s1032 = scalar_lea.vmem [#allocation3], %s1031
        // Predicated region
        $region65: #{tpu_custom_call.1} parent=63 // pred_check
          %p1033 = pneg %p279
        $region66: #{tpu_custom_call.1} parent=63 // pred_check_branch
          %1035 = sbr.rel (%p1033) target = $region68
        $region67: #{tpu_custom_call.1} parent=63 // pred_region
          %s1037 = ssub.s32 256, 256
          %1038 = vsyncadd %s1029, %s1037
          %s1039 = smul.addr %s25, 2
          %s1040 = smul.addr %s1039, 128
          %s1041 = scalar_lea.hbm %s11, %s1040
          %s1043 = sshll.u32 %s1032, 4
          %s1044 = int_to_ptr.vmem [resolvable:$true] %s1043
          %1046 = dma.vmem_to_hbm [thread:$0]  %s1044, 256, %s1041, %s1029
        $region68: #{tpu_custom_call.1} parent=63 // pred_fallthru
          _
      $region64: #{tpu_custom_call.1} parent=5 // pred_fallthru
        _
      %p1047 = scmp.le.s32.totalorder 2, %s20
      // Predicated region
      $region69: #{tpu_custom_call.1} parent=5 // pred_check
        %p1048 = pneg %p1047
      $region70: #{tpu_custom_call.1} parent=5 // pred_check_branch
        %1050 = sbr.rel (%p1048) target = $region72
      $region71: #{tpu_custom_call.1} parent=5 // pred_region
        %s1051 = ssub.s32 %s20, 2
        // Predicated region
        $region73: #{tpu_custom_call.1} parent=71 // pred_check
          %p1052 = pneg %p285
        $region74: #{tpu_custom_call.1} parent=71 // pred_check_branch
          %1054 = sbr.rel (%p1052) target = $region76
        $region75: #{tpu_custom_call.1} parent=71 // pred_region
          %s1055 = sand.u32 %s270, 1
          %s1056 = scalar_lea.sflag [#allocation4], %s1055
          %s1057 = sand.u32 %s270, 1
          %s1058 = smul.addr %s1057, 16
          %s1059 = scalar_lea.vmem [#allocation3], %s1058
          %1060 = dma.done %s1056, 256
        $region76: #{tpu_custom_call.1} parent=71 // pred_fallthru
          _
      $region72: #{tpu_custom_call.1} parent=5 // pred_fallthru
        _
    $region6: #{tpu_custom_call.1} parent=1 // loop_footer
      %s24 = sadd.s32 1, %s20
    $region7: #{tpu_custom_call.1} parent=1 // loop_footer_branch
      %19 = sbr.rel target = $region3
    $region8: #{tpu_custom_call.1} parent=1 // loop_exit
      _
    %1061 = vsyncpa [#allocation4], 1
    %s1062 = scalar_lea.sflag [#allocation4], 1
    %1063 = vsyncpa %s1062, 1

</llo_original>
